<compile_context>
chip_gen: v7x
topology: tpu7x:2x2x1
jax: 0.10.0
libtpu: 0.0.40
codegen_flags: <defaults>
</compile_context>

<pallas_src>
import functools

import jax
import jax.numpy as jnp
from jax.experimental import pallas as pl
from jax.experimental.pallas import tpu as pltpu


# ----------------------------------------------------------------------------- kernel

def _autoencoder_kernel(x_ref,
                        w1, b1, w2, b2, w34, b34, w5, b5, w6, b6,
                        out_ref):
    """Five chained matmuls (bf16 in, f32 acc) + ReLUs + fused sigmoid epilogue."""
    # In-kernel cast: x stays in its native dtype in HBM (no wrapper convert/pad
    # pass); the cast rides the VPU slot underneath the DMAs.
    h = x_ref[...].astype(jnp.bfloat16)                             # (tile, 512)

    # encoder: Linear(512,128) -> ReLU -> Linear(128,32) -> ReLU
    h = jnp.dot(h, w1[...], preferred_element_type=jnp.float32) + b1[...]
    h = jnp.maximum(h, 0.0).astype(jnp.bfloat16)
    h = jnp.dot(h, w2[...], preferred_element_type=jnp.float32) + b2[...]
    h = jnp.maximum(h, 0.0).astype(jnp.bfloat16)

    # fused bottleneck: Linear(32,8) ∘ Linear(8,32) == single (32,32) layer.
    # Exact: the original module has NO nonlinearity on the 8-dim latent
    # (encoder ends with Linear(32,8); decoder starts with Linear(8,32)),
    # the decoder's ReLU follows the fused layer here.
    h = jnp.dot(h, w34[...], preferred_element_type=jnp.float32) + b34[...]
    h = jnp.maximum(h, 0.0).astype(jnp.bfloat16)

    # decoder tail: Linear(32,128) -> ReLU -> Linear(128,512) -> Sigmoid
    h = jnp.dot(h, w5[...], preferred_element_type=jnp.float32) + b5[...]
    h = jnp.maximum(h, 0.0).astype(jnp.bfloat16)
    h = jnp.dot(h, w6[...], preferred_element_type=jnp.float32) + b6[...]

    # sigmoid: exp + approx reciprocal, both on the EUP slot (free when the
    # kernel is HBM-bound).  Kept in f32 (v5e's EUP has no bf16).
    e = jnp.exp(-h)
    out_ref[...] = pl.reciprocal(1.0 + e, approx=True).astype(out_ref.dtype)


# ----------------------------------------------------------------------------- wrapper

def _round_up(n, m):
    return ((n + m - 1) // m) * m


@functools.lru_cache(maxsize=1)
def _num_tensorcores():
    """1 for single-TC chips (v5e/v6e), 2 for megacore / dual-TC chips (v4/v5p/v7x)."""
    try:
        kind = jax.devices()[0].device_kind.lower()
    except Exception:
        return 1
    return 2 if any(tag in kind for tag in ("v7", "v5p", "v4")) else 1


def _choose_tile(B, batch_tile):
    """Batch tile: as large as allowed on single-TC chips; on dual-TC chips split
    the batch evenly across the two TensorCores, never below 256 rows."""
    full = min(batch_tile, _round_up(B, 16))
    if _num_tensorcores() >= 2 and B >= 512:
        tile = max(256, _round_up(pl.cdiv(B, 2), 256))
        return min(tile, full)
    return full


def _prepare_params(params):
    """Transposed-(in,out) params -> [W1,b1, W2,b2, W34,b34, W5,b5, W6,b6] with
    bf16 weights, f32 biases and the 32->8->32 bottleneck fused (exactly, in f32)."""
    (w1, b1), (w2, b2), (w3, b3), (w4, b4), (w5, b5), (w6, b6) = params
    w34 = w3.astype(jnp.float32) @ w4.astype(jnp.float32)                  # (32, 32)
    b34 = b3.astype(jnp.float32) @ w4.astype(jnp.float32) + b4.astype(jnp.float32)
    flat = []
    for w, b in ((w1, b1), (w2, b2), (w34, b34), (w5, b5), (w6, b6)):
        flat.append(w.astype(jnp.bfloat16))
        flat.append(b.astype(jnp.float32))
    return flat


_MM_DIMS = ((512, 128), (128, 32), (32, 32), (32, 128), (128, 512))
_FLOPS_PER_SAMPLE = 2 * sum(i * o for i, o in _MM_DIMS)
_WEIGHT_BYTES = 2 * sum(i * o for i, o in _MM_DIMS) + 4 * sum(o for _, o in _MM_DIMS)


@functools.partial(jax.jit, static_argnames=("batch_tile", "out_dtype"))
def autoencoder_forward(x, params, *, batch_tile=1024, out_dtype=jnp.bfloat16):
    """x: (B, 512). params: list of 6 (W_t, b), W_t = (in, out), b = (1, out).

    Output is bf16 by default (halves the dominant writeback DMA; sigmoid output
    in [0,1] loses nothing meaningful).  Pass out_dtype=jnp.float32 for f32."""
    B, D = x.shape
    assert D == 512

    tile = _choose_tile(B, batch_tile)
    grid = (pl.cdiv(B, tile),)      # ragged tail: Pallas masks the partial block

    flat_params = _prepare_params(params)

    # Weights/biases are tiny full blocks whose block index never changes, so
    # Pallas DMAs them only once.  (pl.Buffered(1) would save their second VMEM
    # buffer, ~0.3 MiB; skipped as a negligible micro-opt.)
    weight_specs = [pl.BlockSpec(arr.shape, lambda i: (0, 0)) for arr in flat_params]

    out_itemsize = jnp.dtype(out_dtype).itemsize
    cost = pl.CostEstimate(
        flops=int(_FLOPS_PER_SAMPLE * B),
        transcendentals=int(512 * B),                         # exp in the sigmoid
        bytes_accessed=int(B * 512 * (x.dtype.itemsize + out_itemsize)
                           + _WEIGHT_BYTES),
    )

    # Explicit VMEM budget: double-buffered in/out tiles + weights + in-kernel
    # f32 temps.  Keeps big tiles legal on v5e's 16 MiB scoped default and stays
    # within v7x's 64 MiB physical VMEM.
    vmem_budget = (2 * tile * 512 * x.dtype.itemsize
                   + 2 * tile * 512 * out_itemsize
                   + 2 * _WEIGHT_BYTES
                   + 6 * tile * 512 * 4)
    vmem_limit = int(min(max(vmem_budget, 32 * 1024 * 1024), 64 * 1024 * 1024))

    return pl.pallas_call(
        _autoencoder_kernel,
        out_shape=jax.ShapeDtypeStruct((B, 512), out_dtype),
        grid_spec=pltpu.PrefetchScalarGridSpec(
            num_scalar_prefetch=0,
            grid=grid,
            in_specs=[pl.BlockSpec((tile, 512), lambda i: (i, 0))] + weight_specs,
            out_specs=pl.BlockSpec((tile, 512), lambda i: (i, 0)),
        ),
        compiler_params=pltpu.CompilerParams(
            dimension_semantics=("parallel",),
            vmem_limit_bytes=vmem_limit),
        cost_estimate=cost,
    )(x, *flat_params)


# ----------------------------------------------------------------------------- init & reference

def _init_linear(key, in_f, out_f):
    """Deterministic init mimicking torch.nn.Linear default (uniform +/- 1/sqrt(in))."""
    kw, kb = jax.random.split(key)
    bound = 1.0 / jnp.sqrt(jnp.float32(in_f))
    # PyTorch stores W as (out, in); we keep the transposed (in, out) for x @ W_t.
    w_t = jax.random.uniform(kw, (in_f, out_f), jnp.float32, -bound, bound)
    b = jax.random.uniform(kb, (1, out_f), jnp.float32, -bound, bound)
    return w_t, b


def init_autoencoder_params(key):
    dims = [(512, 128), (128, 32), (32, 8),     # encoder
            (8, 32), (32, 128), (128, 512)]     # decoder
    keys = jax.random.split(key, len(dims))
    return [_init_linear(k, i, o) for k, (i, o) in zip(keys, dims)]


def _reference_forward(x, params):
    """Pure-JAX f32 reference (un-fused, 6 layers, exact sigmoid)."""
    h = x
    h = jnp.maximum(h @ params[0][0] + params[0][1], 0.0)
    h = jnp.maximum(h @ params[1][0] + params[1][1], 0.0)
    h = h @ params[2][0] + params[2][1]
    h = jnp.maximum(h @ params[3][0] + params[3][1], 0.0)
    h = jnp.maximum(h @ params[4][0] + params[4][1], 0.0)
    h = h @ params[5][0] + params[5][1]
    return jax.nn.sigmoid(h)


# ----------------------------------------------------------------------------- main

if __name__ == "__main__":
    key = jax.random.PRNGKey(0)
    k_params, k_x = jax.random.split(key)

    params = init_autoencoder_params(k_params)

    # Small batch of flattened inputs with 512 features (the encoder's input size).
    B = 16
    x = jax.random.normal(k_x, (B, 512), jnp.float32)

    out = jax.block_until_ready(autoencoder_forward(x, params))
    ref = _reference_forward(x, params)
    assert out.shape == (B, 512) and out.dtype == jnp.bfloat16
    # bf16 matmuls + bf16 output + approx reciprocal => relaxed tolerance vs f32 ref.
    err = jnp.max(jnp.abs(out.astype(jnp.float32) - ref))
    assert jnp.allclose(out.astype(jnp.float32), ref, atol=3e-2, rtol=3e-2), \
        f"max abs err {err}"

    # Ragged batch (not a tile multiple): handled by grid masking, no pad/slice.
    B2 = 13
    x2 = jax.random.normal(k_x, (B2, 512), jnp.float32)
    out2 = jax.block_until_ready(autoencoder_forward(x2, params))
    ref2 = _reference_forward(x2, params)
    assert out2.shape == (B2, 512)
    assert jnp.allclose(out2.astype(jnp.float32), ref2, atol=3e-2, rtol=3e-2)

    print("KERNEL_OK")
</pallas_src>

<mosaic_0001>
module attributes {stable_mosaic.version = 11 : i64} {
  func.func @_autoencoder_kernel(%arg0: i32, %arg1: memref<16x512xf32, #tpu.memory_space<vmem>>, %arg2: memref<512x128xbf16, #tpu.memory_space<vmem>>, %arg3: memref<1x128xf32, #tpu.memory_space<vmem>>, %arg4: memref<128x32xbf16, #tpu.memory_space<vmem>>, %arg5: memref<1x32xf32, #tpu.memory_space<vmem>>, %arg6: memref<32x32xbf16, #tpu.memory_space<vmem>>, %arg7: memref<1x32xf32, #tpu.memory_space<vmem>>, %arg8: memref<32x128xbf16, #tpu.memory_space<vmem>>, %arg9: memref<1x128xf32, #tpu.memory_space<vmem>>, %arg10: memref<128x512xbf16, #tpu.memory_space<vmem>>, %arg11: memref<1x512xf32, #tpu.memory_space<vmem>>, %arg12: memref<16x512xbf16, #tpu.memory_space<vmem>>) attributes {dimension_semantics = [#tpu.dimension_semantics<parallel>], iteration_bounds = array<i64: 1>, scalar_prefetch = 0 : i64, scratch_operands = 0 : i64, tpu.core_type = #tpu.core_type<tc>, window_params = [{transform_indices = @transform_0, window_bounds = array<i64: 16, 512>}, {pipeline_mode = #tpu.pipeline_mode<synchronous>, transform_indices = @transform_1, window_bounds = array<i64: 512, 128>}, {pipeline_mode = #tpu.pipeline_mode<synchronous>, transform_indices = @transform_2, window_bounds = array<i64: 1, 128>}, {pipeline_mode = #tpu.pipeline_mode<synchronous>, transform_indices = @transform_3, window_bounds = array<i64: 128, 32>}, {pipeline_mode = #tpu.pipeline_mode<synchronous>, transform_indices = @transform_4, window_bounds = array<i64: 1, 32>}, {pipeline_mode = #tpu.pipeline_mode<synchronous>, transform_indices = @transform_5, window_bounds = array<i64: 32, 32>}, {pipeline_mode = #tpu.pipeline_mode<synchronous>, transform_indices = @transform_6, window_bounds = array<i64: 1, 32>}, {pipeline_mode = #tpu.pipeline_mode<synchronous>, transform_indices = @transform_7, window_bounds = array<i64: 32, 128>}, {pipeline_mode = #tpu.pipeline_mode<synchronous>, transform_indices = @transform_8, window_bounds = array<i64: 1, 128>}, {pipeline_mode = #tpu.pipeline_mode<synchronous>, transform_indices = @transform_9, window_bounds = array<i64: 128, 512>}, {pipeline_mode = #tpu.pipeline_mode<synchronous>, transform_indices = @transform_10, window_bounds = array<i64: 1, 512>}, {transform_indices = @transform_11, window_bounds = array<i64: 16, 512>}]} {
    %c0 = arith.constant 0 : index
    %c0_0 = arith.constant 0 : index
    %0 = vector.load %arg1[%c0, %c0_0] : memref<16x512xf32, #tpu.memory_space<vmem>>, vector<16x512xf32>
    %1 = arith.truncf %0 : vector<16x512xf32> to vector<16x512xbf16>
    %c0_1 = arith.constant 0 : index
    %c0_2 = arith.constant 0 : index
    %2 = vector.load %arg2[%c0_1, %c0_2] : memref<512x128xbf16, #tpu.memory_space<vmem>>, vector<512x128xbf16>
    %cst = arith.constant dense<0.000000e+00> : vector<16x128xf32>
    %3 = tpu.matmul %1, %2, %cst {dimension_numbers = #tpu.dot_dimension_numbers<[1], [0], [0], [1], [0, 0, 1, 1], [], []>} : vector<16x512xbf16>, vector<512x128xbf16>, vector<16x128xf32> -> vector<16x128xf32>
    %c0_3 = arith.constant 0 : index
    %c0_4 = arith.constant 0 : index
    %4 = vector.load %arg3[%c0_3, %c0_4] : memref<1x128xf32, #tpu.memory_space<vmem>>, vector<1x128xf32>
    %5 = vector.broadcast %4 : vector<1x128xf32> to vector<16x128xf32>
    %6 = arith.addf %3, %5 : vector<16x128xf32>
    %cst_5 = arith.constant 0.000000e+00 : f32
    %7 = vector.broadcast %cst_5 : f32 to vector<16x128xf32>
    %8 = arith.maximumf %6, %7 : vector<16x128xf32>
    %9 = arith.truncf %8 : vector<16x128xf32> to vector<16x128xbf16>
    %c0_6 = arith.constant 0 : index
    %c0_7 = arith.constant 0 : index
    %10 = vector.load %arg4[%c0_6, %c0_7] : memref<128x32xbf16, #tpu.memory_space<vmem>>, vector<128x32xbf16>
    %cst_8 = arith.constant dense<0.000000e+00> : vector<16x32xf32>
    %11 = tpu.matmul %9, %10, %cst_8 {dimension_numbers = #tpu.dot_dimension_numbers<[1], [0], [0], [1], [0, 0, 1, 1], [], []>} : vector<16x128xbf16>, vector<128x32xbf16>, vector<16x32xf32> -> vector<16x32xf32>
    %c0_9 = arith.constant 0 : index
    %c0_10 = arith.constant 0 : index
    %12 = vector.load %arg5[%c0_9, %c0_10] : memref<1x32xf32, #tpu.memory_space<vmem>>, vector<1x32xf32>
    %13 = vector.broadcast %12 : vector<1x32xf32> to vector<16x32xf32>
    %14 = arith.addf %11, %13 : vector<16x32xf32>
    %cst_11 = arith.constant 0.000000e+00 : f32
    %15 = vector.broadcast %cst_11 : f32 to vector<16x32xf32>
    %16 = arith.maximumf %14, %15 : vector<16x32xf32>
    %17 = arith.truncf %16 : vector<16x32xf32> to vector<16x32xbf16>
    %c0_12 = arith.constant 0 : index
    %c0_13 = arith.constant 0 : index
    %18 = vector.load %arg6[%c0_12, %c0_13] : memref<32x32xbf16, #tpu.memory_space<vmem>>, vector<32x32xbf16>
    %cst_14 = arith.constant dense<0.000000e+00> : vector<16x32xf32>
    %19 = tpu.matmul %17, %18, %cst_14 {dimension_numbers = #tpu.dot_dimension_numbers<[1], [0], [0], [1], [0, 0, 1, 1], [], []>} : vector<16x32xbf16>, vector<32x32xbf16>, vector<16x32xf32> -> vector<16x32xf32>
    %c0_15 = arith.constant 0 : index
    %c0_16 = arith.constant 0 : index
    %20 = vector.load %arg7[%c0_15, %c0_16] : memref<1x32xf32, #tpu.memory_space<vmem>>, vector<1x32xf32>
    %21 = vector.broadcast %20 : vector<1x32xf32> to vector<16x32xf32>
    %22 = arith.addf %19, %21 : vector<16x32xf32>
    %cst_17 = arith.constant 0.000000e+00 : f32
    %23 = vector.broadcast %cst_17 : f32 to vector<16x32xf32>
    %24 = arith.maximumf %22, %23 : vector<16x32xf32>
    %25 = arith.truncf %24 : vector<16x32xf32> to vector<16x32xbf16>
    %c0_18 = arith.constant 0 : index
    %c0_19 = arith.constant 0 : index
    %26 = vector.load %arg8[%c0_18, %c0_19] : memref<32x128xbf16, #tpu.memory_space<vmem>>, vector<32x128xbf16>
    %cst_20 = arith.constant dense<0.000000e+00> : vector<16x128xf32>
    %27 = tpu.matmul %25, %26, %cst_20 {dimension_numbers = #tpu.dot_dimension_numbers<[1], [0], [0], [1], [0, 0, 1, 1], [], []>} : vector<16x32xbf16>, vector<32x128xbf16>, vector<16x128xf32> -> vector<16x128xf32>
    %c0_21 = arith.constant 0 : index
    %c0_22 = arith.constant 0 : index
    %28 = vector.load %arg9[%c0_21, %c0_22] : memref<1x128xf32, #tpu.memory_space<vmem>>, vector<1x128xf32>
    %29 = vector.broadcast %28 : vector<1x128xf32> to vector<16x128xf32>
    %30 = arith.addf %27, %29 : vector<16x128xf32>
    %cst_23 = arith.constant 0.000000e+00 : f32
    %31 = vector.broadcast %cst_23 : f32 to vector<16x128xf32>
    %32 = arith.maximumf %30, %31 : vector<16x128xf32>
    %33 = arith.truncf %32 : vector<16x128xf32> to vector<16x128xbf16>
    %c0_24 = arith.constant 0 : index
    %c0_25 = arith.constant 0 : index
    %34 = vector.load %arg10[%c0_24, %c0_25] : memref<128x512xbf16, #tpu.memory_space<vmem>>, vector<128x512xbf16>
    %cst_26 = arith.constant dense<0.000000e+00> : vector<16x512xf32>
    %35 = tpu.matmul %33, %34, %cst_26 {dimension_numbers = #tpu.dot_dimension_numbers<[1], [0], [0], [1], [0, 0, 1, 1], [], []>} : vector<16x128xbf16>, vector<128x512xbf16>, vector<16x512xf32> -> vector<16x512xf32>
    %c0_27 = arith.constant 0 : index
    %c0_28 = arith.constant 0 : index
    %36 = vector.load %arg11[%c0_27, %c0_28] : memref<1x512xf32, #tpu.memory_space<vmem>>, vector<1x512xf32>
    %37 = vector.broadcast %36 : vector<1x512xf32> to vector<16x512xf32>
    %38 = arith.addf %35, %37 : vector<16x512xf32>
    %cst_29 = arith.constant 0.000000e+00 : f32
    %39 = vector.broadcast %cst_29 : f32 to vector<16x512xf32>
    %40 = arith.subf %39, %38 : vector<16x512xf32>
    %41 = math.exp %40 : vector<16x512xf32>
    %cst_30 = arith.constant 1.000000e+00 : f32
    %42 = vector.broadcast %cst_30 : f32 to vector<16x512xf32>
    %43 = arith.addf %42, %41 : vector<16x512xf32>
    %44 = tpu.reciprocal %43 {approx = true} : vector<16x512xf32> -> vector<16x512xf32>
    %45 = arith.truncf %44 : vector<16x512xf32> to vector<16x512xbf16>
    %c0_31 = arith.constant 0 : index
    %c0_32 = arith.constant 0 : index
    %46 = vector.load %arg12[%c0_31, %c0_32] : memref<16x512xbf16, #tpu.memory_space<vmem>>, vector<16x512xbf16>
    tpu.vector_store %arg12[%c0_31, %c0_32], %45 {strides = array<i32>} : memref<16x512xbf16, #tpu.memory_space<vmem>>, vector<16x512xbf16>,
    return
  }
  func.func @transform_0(%arg0: i32) -> (i32, i32) {
    %c0_i32 = arith.constant 0 : i32
    %c0_i32_0 = arith.constant 0 : i32
    return %arg0, %c0_i32 : i32, i32
  }
  func.func @transform_1(%arg0: i32) -> (i32, i32) {
    %c0_i32 = arith.constant 0 : i32
    %c0_i32_0 = arith.constant 0 : i32
    %c0_i32_1 = arith.constant 0 : i32
    return %c0_i32, %c0_i32_0 : i32, i32
  }
  func.func @transform_2(%arg0: i32) -> (i32, i32) {
    %c0_i32 = arith.constant 0 : i32
    %c0_i32_0 = arith.constant 0 : i32
    %c0_i32_1 = arith.constant 0 : i32
    return %c0_i32, %c0_i32_0 : i32, i32
  }
  func.func @transform_3(%arg0: i32) -> (i32, i32) {
    %c0_i32 = arith.constant 0 : i32
    %c0_i32_0 = arith.constant 0 : i32
    %c0_i32_1 = arith.constant 0 : i32
    return %c0_i32, %c0_i32_0 : i32, i32
  }
  func.func @transform_4(%arg0: i32) -> (i32, i32) {
    %c0_i32 = arith.constant 0 : i32
    %c0_i32_0 = arith.constant 0 : i32
    %c0_i32_1 = arith.constant 0 : i32
    return %c0_i32, %c0_i32_0 : i32, i32
  }
  func.func @transform_5(%arg0: i32) -> (i32, i32) {
    %c0_i32 = arith.constant 0 : i32
    %c0_i32_0 = arith.constant 0 : i32
    %c0_i32_1 = arith.constant 0 : i32
    return %c0_i32, %c0_i32_0 : i32, i32
  }
  func.func @transform_6(%arg0: i32) -> (i32, i32) {
    %c0_i32 = arith.constant 0 : i32
    %c0_i32_0 = arith.constant 0 : i32
    %c0_i32_1 = arith.constant 0 : i32
    return %c0_i32, %c0_i32_0 : i32, i32
  }
  func.func @transform_7(%arg0: i32) -> (i32, i32) {
    %c0_i32 = arith.constant 0 : i32
    %c0_i32_0 = arith.constant 0 : i32
    %c0_i32_1 = arith.constant 0 : i32
    return %c0_i32, %c0_i32_0 : i32, i32
  }
  func.func @transform_8(%arg0: i32) -> (i32, i32) {
    %c0_i32 = arith.constant 0 : i32
    %c0_i32_0 = arith.constant 0 : i32
    %c0_i32_1 = arith.constant 0 : i32
    return %c0_i32, %c0_i32_0 : i32, i32
  }
  func.func @transform_9(%arg0: i32) -> (i32, i32) {
    %c0_i32 = arith.constant 0 : i32
    %c0_i32_0 = arith.constant 0 : i32
    %c0_i32_1 = arith.constant 0 : i32
    return %c0_i32, %c0_i32_0 : i32, i32
  }
  func.func @transform_10(%arg0: i32) -> (i32, i32) {
    %c0_i32 = arith.constant 0 : i32
    %c0_i32_0 = arith.constant 0 : i32
    %c0_i32_1 = arith.constant 0 : i32
    return %c0_i32, %c0_i32_0 : i32, i32
  }
  func.func @transform_11(%arg0: i32) -> (i32, i32) {
    %c0_i32 = arith.constant 0 : i32
    %c0_i32_0 = arith.constant 0 : i32
    return %arg0, %c0_i32 : i32, i32
  }
}

</mosaic_0001>

<llo_original>
// kernel: autoencoder_forward.1
$region0: #{autoencoder_forward.1}
  #allocation0 [shape = 'u32[]', space=smem, size = 0x4, offset = 0x4, fixed_abs, tag = 'smem constant byte address 0x4 - core index']
  #allocation1 [shape = 'u32[144,128]{1,0:T(1,128)}', space=vmem, size = 0x12000, scoped, tag = 'internal scratch']
  %s0 = inlined_call_operand.vmem [shape: f32[16,512], index: 0, kind: input, shape index: {}]
  %s1 = inlined_call_operand.vmem [shape: bf16[512,128], index: 1, kind: input, shape index: {}]
  %s2 = inlined_call_operand.vmem [shape: f32[1,128], index: 2, kind: input, shape index: {}]
  %s3 = inlined_call_operand.vmem [shape: bf16[128,32], index: 3, kind: input, shape index: {}]
  %s4 = inlined_call_operand.vmem [shape: f32[1,32], index: 4, kind: input, shape index: {}]
  %s5 = inlined_call_operand.vmem [shape: bf16[32,32], index: 5, kind: input, shape index: {}]
  %s6 = inlined_call_operand.vmem [shape: f32[1,32], index: 6, kind: input, shape index: {}]
  %s7 = inlined_call_operand.vmem [shape: bf16[32,128], index: 7, kind: input, shape index: {}]
  %s8 = inlined_call_operand.vmem [shape: f32[1,128], index: 8, kind: input, shape index: {}]
  %s9 = inlined_call_operand.vmem [shape: bf16[128,512], index: 9, kind: input, shape index: {}]
  %s10 = inlined_call_operand.vmem [shape: f32[1,512], index: 10, kind: input, shape index: {}]
  %s11 = inlined_call_operand.hbm [shape: bf16[16,512], index: 11, kind: output, shape index: {}]
  %s12 = sld [smem:[#allocation0]]
  $region54: #{autoencoder_forward.1} parent=0
    _
  %s14 = ssub.s32 1, %s12
  %s15 = scalar_select 0, %s14, %s12
  $region1: #{autoencoder_forward.1} parent=0
    #allocation2 [shape = 'u8[16384]{0}', space=vmem, size = 0x4000, scoped, tag = 'output window, operand 0, single buffered']
    #allocation3 [shape = 's32[1]{0}', space=sflag, size = 0x4, scoped, tag = 'scoped memory for autoencoder_forward.1']
    %16 = vsyncpa [#allocation3], 0
    // Predicated region
    $region2: #{autoencoder_forward.1} parent=1 // pred_check
      _
    $region3: #{autoencoder_forward.1} parent=1 // pred_check_branch
      %18 = sbr.rel (0) target = $region5
    $region4: #{autoencoder_forward.1} parent=1 // pred_region
      _
    $region5: #{autoencoder_forward.1} parent=1 // pred_fallthru
      _
    // Predicated region
    $region6: #{autoencoder_forward.1} parent=1 // pred_check
      _
    $region7: #{autoencoder_forward.1} parent=1 // pred_check_branch
      %20 = sbr.rel (0) target = $region9
    $region8: #{autoencoder_forward.1} parent=1 // pred_region
      _
    $region9: #{autoencoder_forward.1} parent=1 // pred_fallthru
      _
    // Predicated region
    $region10: #{autoencoder_forward.1} parent=1 // pred_check
      _
    $region11: #{autoencoder_forward.1} parent=1 // pred_check_branch
      %22 = sbr.rel (0) target = $region13
    $region12: #{autoencoder_forward.1} parent=1 // pred_region
      _
    $region13: #{autoencoder_forward.1} parent=1 // pred_fallthru
      _
    // Predicated region
    $region14: #{autoencoder_forward.1} parent=1 // pred_check
      _
    $region15: #{autoencoder_forward.1} parent=1 // pred_check_branch
      %24 = sbr.rel (0) target = $region17
    $region16: #{autoencoder_forward.1} parent=1 // pred_region
      _
    $region17: #{autoencoder_forward.1} parent=1 // pred_fallthru
      _
    // Predicated region
    $region18: #{autoencoder_forward.1} parent=1 // pred_check
      _
    $region19: #{autoencoder_forward.1} parent=1 // pred_check_branch
      %26 = sbr.rel (0) target = $region21
    $region20: #{autoencoder_forward.1} parent=1 // pred_region
      _
    $region21: #{autoencoder_forward.1} parent=1 // pred_fallthru
      _
    // Predicated region
    $region22: #{autoencoder_forward.1} parent=1 // pred_check
      _
    $region23: #{autoencoder_forward.1} parent=1 // pred_check_branch
      %28 = sbr.rel (0) target = $region25
    $region24: #{autoencoder_forward.1} parent=1 // pred_region
      _
    $region25: #{autoencoder_forward.1} parent=1 // pred_fallthru
      _
    // Predicated region
    $region26: #{autoencoder_forward.1} parent=1 // pred_check
      _
    $region27: #{autoencoder_forward.1} parent=1 // pred_check_branch
      %30 = sbr.rel (0) target = $region29
    $region28: #{autoencoder_forward.1} parent=1 // pred_region
      _
    $region29: #{autoencoder_forward.1} parent=1 // pred_fallthru
      _
    // Predicated region
    $region30: #{autoencoder_forward.1} parent=1 // pred_check
      _
    $region31: #{autoencoder_forward.1} parent=1 // pred_check_branch
      %32 = sbr.rel (0) target = $region33
    $region32: #{autoencoder_forward.1} parent=1 // pred_region
      _
    $region33: #{autoencoder_forward.1} parent=1 // pred_fallthru
      _
    // Predicated region
    $region34: #{autoencoder_forward.1} parent=1 // pred_check
      _
    $region35: #{autoencoder_forward.1} parent=1 // pred_check_branch
      %34 = sbr.rel (0) target = $region37
    $region36: #{autoencoder_forward.1} parent=1 // pred_region
      _
    $region37: #{autoencoder_forward.1} parent=1 // pred_fallthru
      _
    // Predicated region
    $region38: #{autoencoder_forward.1} parent=1 // pred_check
      _
    $region39: #{autoencoder_forward.1} parent=1 // pred_check_branch
      %36 = sbr.rel (0) target = $region41
    $region40: #{autoencoder_forward.1} parent=1 // pred_region
      _
    $region41: #{autoencoder_forward.1} parent=1 // pred_fallthru
      _
    // Predicated region
    $region42: #{autoencoder_forward.1} parent=1 // pred_check
      _
    $region43: #{autoencoder_forward.1} parent=1 // pred_check_branch
      %38 = sbr.rel (0) target = $region45
    $region44: #{autoencoder_forward.1} parent=1 // pred_region
      _
    $region45: #{autoencoder_forward.1} parent=1 // pred_fallthru
      _
    %v40 = vld [vmem:[%s0] sm:$0xff]
    %v41 = vld [vmem:[%s0 + $0x8] sm:$0xff]
    %v42 = vld [vmem:[%s0 + $0x10] sm:$0xff]
    %v43 = vld [vmem:[%s0 + $0x18] sm:$0xff]
    %v44 = vld [vmem:[%s0 + $0x20] sm:$0xff]
    %v45 = vld [vmem:[%s0 + $0x28] sm:$0xff]
    %v46 = vld [vmem:[%s0 + $0x30] sm:$0xff]
    %v47 = vld [vmem:[%s0 + $0x38] sm:$0xff]
    %v48 = vpack.c.bf16 %v44, %v40
    %v49 = vpack.c.bf16 %v45, %v41
    %v50 = vpack.c.bf16 %v46, %v42
    %v51 = vpack.c.bf16 %v47, %v43
    %v52 = vld [vmem:[%s1] sm:$0xf]
    %v53 = vld [vmem:[%s1 + $0x4] sm:$0xf]
    %v54 = vld [vmem:[%s1 + $0x8] sm:$0xf]
    %v55 = vld [vmem:[%s1 + $0xc] sm:$0xf]
    %v56 = vld [vmem:[%s1 + $0x10] sm:$0xf]
    %v57 = vld [vmem:[%s1 + $0x14] sm:$0xf]
    %v58 = vld [vmem:[%s1 + $0x18] sm:$0xf]
    %v59 = vld [vmem:[%s1 + $0x1c] sm:$0xf]
    %v60 = vld [vmem:[%s1 + $0x20] sm:$0xf]
    %v61 = vld [vmem:[%s1 + $0x24] sm:$0xf]
    %v62 = vld [vmem:[%s1 + $0x28] sm:$0xf]
    %v63 = vld [vmem:[%s1 + $0x2c] sm:$0xf]
    %v64 = vld [vmem:[%s1 + $0x30] sm:$0xf]
    %v65 = vld [vmem:[%s1 + $0x34] sm:$0xf]
    %v66 = vld [vmem:[%s1 + $0x38] sm:$0xf]
    %v67 = vld [vmem:[%s1 + $0x3c] sm:$0xf]
    %v68 = vld [vmem:[%s1 + $0x40] sm:$0xf]
    %v69 = vld [vmem:[%s1 + $0x44] sm:$0xf]
    %v70 = vld [vmem:[%s1 + $0x48] sm:$0xf]
    %v71 = vld [vmem:[%s1 + $0x4c] sm:$0xf]
    %v72 = vld [vmem:[%s1 + $0x50] sm:$0xf]
    %v73 = vld [vmem:[%s1 + $0x54] sm:$0xf]
    %v74 = vld [vmem:[%s1 + $0x58] sm:$0xf]
    %v75 = vld [vmem:[%s1 + $0x5c] sm:$0xf]
    %v76 = vld [vmem:[%s1 + $0x60] sm:$0xf]
    %v77 = vld [vmem:[%s1 + $0x64] sm:$0xf]
    %v78 = vld [vmem:[%s1 + $0x68] sm:$0xf]
    %v79 = vld [vmem:[%s1 + $0x6c] sm:$0xf]
    %v80 = vld [vmem:[%s1 + $0x70] sm:$0xf]
    %v81 = vld [vmem:[%s1 + $0x74] sm:$0xf]
    %v82 = vld [vmem:[%s1 + $0x78] sm:$0xf]
    %v83 = vld [vmem:[%s1 + $0x7c] sm:$0xf]
    %v84 = vld [vmem:[%s1 + $0x80] sm:$0xf]
    %v85 = vld [vmem:[%s1 + $0x84] sm:$0xf]
    %v86 = vld [vmem:[%s1 + $0x88] sm:$0xf]
    %v87 = vld [vmem:[%s1 + $0x8c] sm:$0xf]
    %v88 = vld [vmem:[%s1 + $0x90] sm:$0xf]
    %v89 = vld [vmem:[%s1 + $0x94] sm:$0xf]
    %v90 = vld [vmem:[%s1 + $0x98] sm:$0xf]
    %v91 = vld [vmem:[%s1 + $0x9c] sm:$0xf]
    %v92 = vld [vmem:[%s1 + $0xa0] sm:$0xf]
    %v93 = vld [vmem:[%s1 + $0xa4] sm:$0xf]
    %v94 = vld [vmem:[%s1 + $0xa8] sm:$0xf]
    %v95 = vld [vmem:[%s1 + $0xac] sm:$0xf]
    %v96 = vld [vmem:[%s1 + $0xb0] sm:$0xf]
    %v97 = vld [vmem:[%s1 + $0xb4] sm:$0xf]
    %v98 = vld [vmem:[%s1 + $0xb8] sm:$0xf]
    %v99 = vld [vmem:[%s1 + $0xbc] sm:$0xf]
    %v100 = vld [vmem:[%s1 + $0xc0] sm:$0xf]
    %v101 = vld [vmem:[%s1 + $0xc4] sm:$0xf]
    %v102 = vld [vmem:[%s1 + $0xc8] sm:$0xf]
    %v103 = vld [vmem:[%s1 + $0xcc] sm:$0xf]
    %v104 = vld [vmem:[%s1 + $0xd0] sm:$0xf]
    %v105 = vld [vmem:[%s1 + $0xd4] sm:$0xf]
    %v106 = vld [vmem:[%s1 + $0xd8] sm:$0xf]
    %v107 = vld [vmem:[%s1 + $0xdc] sm:$0xf]
    %v108 = vld [vmem:[%s1 + $0xe0] sm:$0xf]
    %v109 = vld [vmem:[%s1 + $0xe4] sm:$0xf]
    %v110 = vld [vmem:[%s1 + $0xe8] sm:$0xf]
    %v111 = vld [vmem:[%s1 + $0xec] sm:$0xf]
    %v112 = vld [vmem:[%s1 + $0xf0] sm:$0xf]
    %v113 = vld [vmem:[%s1 + $0xf4] sm:$0xf]
    %v114 = vld [vmem:[%s1 + $0xf8] sm:$0xf]
    %v115 = vld [vmem:[%s1 + $0xfc] sm:$0xf]
    %v116 = vld [vmem:[%s2] sm:$0x1]
    %v118 = vlaneseq
    %v119 = vshrl.u32 %v118, 7
    %v120 = vsub.s32 0, %v119
    %v121 = vrot.slane %v116, %v120
    %v187 = vunpack.c.l.b16 %v52
    %v188 = vunpack.c.l.b16 %v53
    %v189 = vunpack.c.l.b16 %v54
    %v190 = vunpack.c.l.b16 %v55
    %v191 = vunpack.c.l.b16 %v56
    %v192 = vunpack.c.l.b16 %v57
    %v193 = vunpack.c.l.b16 %v58
    %v194 = vunpack.c.l.b16 %v59
    %v195 = vunpack.c.l.b16 %v60
    %v196 = vunpack.c.l.b16 %v61
    %v197 = vunpack.c.l.b16 %v62
    %v198 = vunpack.c.l.b16 %v63
    %v199 = vunpack.c.l.b16 %v64
    %v200 = vunpack.c.l.b16 %v65
    %v201 = vunpack.c.l.b16 %v66
    %v202 = vunpack.c.l.b16 %v67
    %v203 = vunpack.c.l.b16 %v68
    %v204 = vunpack.c.l.b16 %v69
    %v205 = vunpack.c.l.b16 %v70
    %v206 = vunpack.c.l.b16 %v71
    %v207 = vunpack.c.l.b16 %v72
    %v208 = vunpack.c.l.b16 %v73
    %v209 = vunpack.c.l.b16 %v74
    %v210 = vunpack.c.l.b16 %v75
    %v211 = vunpack.c.l.b16 %v76
    %v212 = vunpack.c.l.b16 %v77
    %v213 = vunpack.c.l.b16 %v78
    %v214 = vunpack.c.l.b16 %v79
    %v215 = vunpack.c.l.b16 %v80
    %v216 = vunpack.c.l.b16 %v81
    %v217 = vunpack.c.l.b16 %v82
    %v218 = vunpack.c.l.b16 %v83
    %v219 = vunpack.c.l.b16 %v84
    %v220 = vunpack.c.l.b16 %v85
    %v221 = vunpack.c.l.b16 %v86
    %v222 = vunpack.c.l.b16 %v87
    %v223 = vunpack.c.l.b16 %v88
    %v224 = vunpack.c.l.b16 %v89
    %v225 = vunpack.c.l.b16 %v90
    %v226 = vunpack.c.l.b16 %v91
    %v227 = vunpack.c.l.b16 %v92
    %v228 = vunpack.c.l.b16 %v93
    %v229 = vunpack.c.l.b16 %v94
    %v230 = vunpack.c.l.b16 %v95
    %v231 = vunpack.c.l.b16 %v96
    %v232 = vunpack.c.l.b16 %v97
    %v233 = vunpack.c.l.b16 %v98
    %v234 = vunpack.c.l.b16 %v99
    %v235 = vunpack.c.l.b16 %v100
    %v236 = vunpack.c.l.b16 %v101
    %v237 = vunpack.c.l.b16 %v102
    %v238 = vunpack.c.l.b16 %v103
    %v239 = vunpack.c.l.b16 %v104
    %v240 = vunpack.c.l.b16 %v105
    %v241 = vunpack.c.l.b16 %v106
    %v242 = vunpack.c.l.b16 %v107
    %v243 = vunpack.c.l.b16 %v108
    %v244 = vunpack.c.l.b16 %v109
    %v245 = vunpack.c.l.b16 %v110
    %v246 = vunpack.c.l.b16 %v111
    %v247 = vunpack.c.l.b16 %v112
    %v248 = vunpack.c.l.b16 %v113
    %v249 = vunpack.c.l.b16 %v114
    %v250 = vunpack.c.l.b16 %v115
    %v251 = vpack.c.b16 %v188, %v187
    %v252 = vpack.c.b16 %v190, %v189
    %v253 = vpack.c.b16 %v192, %v191
    %v254 = vpack.c.b16 %v194, %v193
    %v255 = vpack.c.b16 %v196, %v195
    %v256 = vpack.c.b16 %v198, %v197
    %v257 = vpack.c.b16 %v200, %v199
    %v258 = vpack.c.b16 %v202, %v201
    %v259 = vpack.c.b16 %v204, %v203
    %v260 = vpack.c.b16 %v206, %v205
    %v261 = vpack.c.b16 %v208, %v207
    %v262 = vpack.c.b16 %v210, %v209
    %v263 = vpack.c.b16 %v212, %v211
    %v264 = vpack.c.b16 %v214, %v213
    %v265 = vpack.c.b16 %v216, %v215
    %v266 = vpack.c.b16 %v218, %v217
    %v267 = vpack.c.b16 %v220, %v219
    %v268 = vpack.c.b16 %v222, %v221
    %v269 = vpack.c.b16 %v224, %v223
    %v270 = vpack.c.b16 %v226, %v225
    %v271 = vpack.c.b16 %v228, %v227
    %v272 = vpack.c.b16 %v230, %v229
    %v273 = vpack.c.b16 %v232, %v231
    %v274 = vpack.c.b16 %v234, %v233
    %v275 = vpack.c.b16 %v236, %v235
    %v276 = vpack.c.b16 %v238, %v237
    %v277 = vpack.c.b16 %v240, %v239
    %v278 = vpack.c.b16 %v242, %v241
    %v279 = vpack.c.b16 %v244, %v243
    %v280 = vpack.c.b16 %v246, %v245
    %v281 = vpack.c.b16 %v248, %v247
    %v282 = vpack.c.b16 %v250, %v249
    %315 = vmatprep.subr.bf16.mxu0 0
    %316 = vmatpush1.bf16.msra.mxu0 %v251
    %317 = vmatprep.subr.bf16.mxu0 0
    %318 = vmatpush1.bf16.msra.mxu0 %v252
    %319 = vmatprep.subr.bf16.mxu0 0
    %320 = vmatpush1.bf16.msra.mxu0 %v253
    %321 = vmatprep.subr.bf16.mxu0 0
    %322 = vmatpush1.bf16.msra.mxu0 %v254
    %323 = vmatprep.subr.bf16.mxu0 0
    %324 = vmatpush1.bf16.msra.mxu0 %v255
    %325 = vmatprep.subr.bf16.mxu0 0
    %326 = vmatpush1.bf16.msra.mxu0 %v256
    %327 = vmatprep.subr.bf16.mxu0 0
    %328 = vmatpush1.bf16.msra.mxu0 %v257
    %329 = vmatprep.subr.bf16.mxu0 0
    %330 = vmatpush1.bf16.msra.mxu0 %v258
    %331 = vmatprep.subr.bf16.mxu0 0
    %332 = vmatpush1.bf16.msra.mxu0 %v259
    %333 = vmatprep.subr.bf16.mxu0 0
    %334 = vmatpush1.bf16.msra.mxu0 %v260
    %335 = vmatprep.subr.bf16.mxu0 0
    %336 = vmatpush1.bf16.msra.mxu0 %v261
    %337 = vmatprep.subr.bf16.mxu0 0
    %338 = vmatpush1.bf16.msra.mxu0 %v262
    %339 = vmatprep.subr.bf16.mxu0 0
    %340 = vmatpush1.bf16.msra.mxu0 %v263
    %341 = vmatprep.subr.bf16.mxu0 0
    %342 = vmatpush1.bf16.msra.mxu0 %v264
    %343 = vmatprep.subr.bf16.mxu0 0
    %344 = vmatpush1.bf16.msra.mxu0 %v265
    %345 = vmatprep.subr.bf16.mxu0 0
    %346 = vmatpush1.bf16.msra.mxu0 %v266
    %347 = vmatprep.mubr.bf16.mxu0 %v49
    %348 = vmatmul.mubr.bf16.gmra.mrb[0].mxu0 %v48
    %v349 = vpop.f32.mrb[0].mxu0
    %v350 = vadd.f32 %v121, %v349
    %v351 = vpop.f32.mrb[0].mxu0
    %v352 = vpop.f32.mrb[0].mxu0
    %v353 = vadd.f32 %v121, %v352
    %v354 = vpop.f32.mrb[0].mxu0
    %355 = vdwg.mxu0
    %356 = vmatprep.subr.bf16.mxu0 0
    %357 = vmatpush1.bf16.msra.mxu0 %v267
    %358 = vmatprep.subr.bf16.mxu0 0
    %359 = vmatpush1.bf16.msra.mxu0 %v268
    %360 = vmatprep.subr.bf16.mxu0 0
    %361 = vmatpush1.bf16.msra.mxu0 %v269
    %362 = vmatprep.subr.bf16.mxu0 0
    %363 = vmatpush1.bf16.msra.mxu0 %v270
    %364 = vmatprep.subr.bf16.mxu0 0
    %365 = vmatpush1.bf16.msra.mxu0 %v271
    %366 = vmatprep.subr.bf16.mxu0 0
    %367 = vmatpush1.bf16.msra.mxu0 %v272
    %368 = vmatprep.subr.bf16.mxu0 0
    %369 = vmatpush1.bf16.msra.mxu0 %v273
    %370 = vmatprep.subr.bf16.mxu0 0
    %371 = vmatpush1.bf16.msra.mxu0 %v274
    %372 = vmatprep.subr.bf16.mxu0 0
    %373 = vmatpush1.bf16.msra.mxu0 %v275
    %374 = vmatprep.subr.bf16.mxu0 0
    %375 = vmatpush1.bf16.msra.mxu0 %v276
    %376 = vmatprep.subr.bf16.mxu0 0
    %377 = vmatpush1.bf16.msra.mxu0 %v277
    %378 = vmatprep.subr.bf16.mxu0 0
    %379 = vmatpush1.bf16.msra.mxu0 %v278
    %380 = vmatprep.subr.bf16.mxu0 0
    %381 = vmatpush1.bf16.msra.mxu0 %v279
    %382 = vmatprep.subr.bf16.mxu0 0
    %383 = vmatpush1.bf16.msra.mxu0 %v280
    %384 = vmatprep.subr.bf16.mxu0 0
    %385 = vmatpush1.bf16.msra.mxu0 %v281
    %386 = vmatprep.subr.bf16.mxu0 0
    %387 = vmatpush1.bf16.msra.mxu0 %v282
    %388 = vmatprep.mubr.bf16.mxu0 %v51
    %389 = vmatmul.mubr.bf16.gmra.mrb[0].mxu0 %v50
    %v390 = vpop.f32.mrb[0].mxu0
    %v391 = vadd.f32 %v350, %v390
    %v392 = vpop.f32.mrb[0].mxu0
    %v393 = vpop.f32.mrb[0].mxu0
    %v394 = vadd.f32 %v353, %v393
    %v395 = vpop.f32.mrb[0].mxu0
    %396 = vdwg.mxu0
    %v397 = vmax.f32 %v391, 0.0
    %v398 = vmax.f32 %v394, 0.0
    %v399 = vpack.c.bf16 %v398, %v397
    %v400 = vld [vmem:[%s3] sm:$0xf]
    %v401 = vld [vmem:[%s3 + $0x4] sm:$0xf]
    %v402 = vld [vmem:[%s3 + $0x8] sm:$0xf]
    %v403 = vld [vmem:[%s3 + $0xc] sm:$0xf]
    %v404 = vld [vmem:[%s3 + $0x10] sm:$0xf]
    %v405 = vld [vmem:[%s3 + $0x14] sm:$0xf]
    %v406 = vld [vmem:[%s3 + $0x18] sm:$0xf]
    %v407 = vld [vmem:[%s3 + $0x1c] sm:$0xf]
    %v408 = vld [vmem:[%s3 + $0x20] sm:$0xf]
    %v409 = vld [vmem:[%s3 + $0x24] sm:$0xf]
    %v410 = vld [vmem:[%s3 + $0x28] sm:$0xf]
    %v411 = vld [vmem:[%s3 + $0x2c] sm:$0xf]
    %v412 = vld [vmem:[%s3 + $0x30] sm:$0xf]
    %v413 = vld [vmem:[%s3 + $0x34] sm:$0xf]
    %v414 = vld [vmem:[%s3 + $0x38] sm:$0xf]
    %v415 = vld [vmem:[%s3 + $0x3c] sm:$0xf]
    %v416 = vld [vmem:[%s4] sm:$0x1]
    %v418 = vlaneseq
    %v419 = vshrl.u32 %v418, 7
    %v420 = vsub.s32 0, %v419
    %v421 = vrot.slane %v416, %v420
    %v439 = vunpack.c.l.b16 %v400
    %v440 = vunpack.c.l.b16 %v401
    %v441 = vunpack.c.l.b16 %v402
    %v442 = vunpack.c.l.b16 %v403
    %v443 = vunpack.c.l.b16 %v404
    %v444 = vunpack.c.l.b16 %v405
    %v445 = vunpack.c.l.b16 %v406
    %v446 = vunpack.c.l.b16 %v407
    %v447 = vunpack.c.l.b16 %v408
    %v448 = vunpack.c.l.b16 %v409
    %v449 = vunpack.c.l.b16 %v410
    %v450 = vunpack.c.l.b16 %v411
    %v451 = vunpack.c.l.b16 %v412
    %v452 = vunpack.c.l.b16 %v413
    %v453 = vunpack.c.l.b16 %v414
    %v454 = vunpack.c.l.b16 %v415
    %v455 = vpack.c.b16 %v440, %v439
    %v456 = vpack.c.b16 %v442, %v441
    %v457 = vpack.c.b16 %v444, %v443
    %v458 = vpack.c.b16 %v446, %v445
    %v459 = vpack.c.b16 %v448, %v447
    %v460 = vpack.c.b16 %v450, %v449
    %v461 = vpack.c.b16 %v452, %v451
    %v462 = vpack.c.b16 %v454, %v453
    %471 = vmatprep.subr.bf16.mxu0 0
    %472 = vmatpush1.bf16.msra.mxu0 %v455
    %473 = vmatprep.subr.bf16.mxu0 0
    %474 = vmatpush1.bf16.msra.mxu0 %v456
    %475 = vmatprep.subr.bf16.mxu0 0
    %476 = vmatpush1.bf16.msra.mxu0 %v457
    %477 = vmatprep.subr.bf16.mxu0 0
    %478 = vmatpush1.bf16.msra.mxu0 %v458
    %479 = vmatprep.subr.bf16.mxu0 0
    %480 = vmatpush1.bf16.msra.mxu0 %v459
    %481 = vmatprep.subr.bf16.mxu0 0
    %482 = vmatpush1.bf16.msra.mxu0 %v460
    %483 = vmatprep.subr.bf16.mxu0 0
    %484 = vmatpush1.bf16.msra.mxu0 %v461
    %485 = vmatprep.subr.bf16.mxu0 0
    %486 = vmatpush1.bf16.msra.mxu0 %v462
    %487 = vmatprep.subr.bf16.mxu0 0
    %488 = vmatpush1.bf16.msra.mxu0 0
    %489 = vmatprep.subr.bf16.mxu0 0
    %490 = vmatpush1.bf16.msra.mxu0 0
    %491 = vmatprep.subr.bf16.mxu0 0
    %492 = vmatpush1.bf16.msra.mxu0 0
    %493 = vmatprep.subr.bf16.mxu0 0
    %494 = vmatpush1.bf16.msra.mxu0 0
    %495 = vmatprep.subr.bf16.mxu0 0
    %496 = vmatpush1.bf16.msra.mxu0 0
    %497 = vmatprep.subr.bf16.mxu0 0
    %498 = vmatpush1.bf16.msra.mxu0 0
    %499 = vmatprep.subr.bf16.mxu0 0
    %500 = vmatpush1.bf16.msra.mxu0 0
    %501 = vmatprep.subr.bf16.mxu0 0
    %502 = vmatpush1.bf16.msra.mxu0 0
    %503 = vmatprep.mubr.bf16.mxu0 0
    %504 = vmatmul.mubr.bf16.gmra.mrb[0].mxu0 %v399
    %v505 = vpop.f32.mrb[0].mxu0
    %v506 = vadd.f32 %v421, %v505
    %v507 = vpop.f32.mrb[0].mxu0
    %v508 = vpop.f32.mrb[0].mxu0
    %v509 = vadd.f32 %v421, %v508
    %v510 = vpop.f32.mrb[0].mxu0
    %511 = vdwg.mxu0
    %v512 = vmax.f32 %v506, 0.0
    %v513 = vmax.f32 %v509, 0.0
    %v514 = vpack.c.bf16 %v513, %v512
    %v515 = vld [vmem:[%s5] sm:$0xf]
    %v516 = vld [vmem:[%s5 + $0x4] sm:$0xf]
    %v517 = vld [vmem:[%s5 + $0x8] sm:$0xf]
    %v518 = vld [vmem:[%s5 + $0xc] sm:$0xf]
    %v519 = vld [vmem:[%s6] sm:$0x1]
    %v521 = vlaneseq
    %v522 = vshrl.u32 %v521, 7
    %v523 = vsub.s32 0, %v522
    %v524 = vrot.slane %v519, %v523
    %v530 = vunpack.c.l.b16 %v515
    %v531 = vunpack.c.l.b16 %v516
    %v532 = vunpack.c.l.b16 %v517
    %v533 = vunpack.c.l.b16 %v518
    %v534 = vpack.c.b16 %v531, %v530
    %v535 = vpack.c.b16 %v533, %v532
    %vm538 = vcmask 261120
    %v540 = vsel %vm538, %v514, 0
    %542 = vmatprep.subr.bf16.mxu0 0
    %543 = vmatpush1.bf16.msra.mxu0 %v534
    %544 = vmatprep.subr.bf16.mxu0 0
    %545 = vmatpush1.bf16.msra.mxu0 %v535
    %546 = vmatprep.subr.bf16.mxu0 0
    %547 = vmatpush1.bf16.msra.mxu0 0
    %548 = vmatprep.subr.bf16.mxu0 0
    %549 = vmatpush1.bf16.msra.mxu0 0
    %550 = vmatprep.subr.bf16.mxu0 0
    %551 = vmatpush1.bf16.msra.mxu0 0
    %552 = vmatprep.subr.bf16.mxu0 0
    %553 = vmatpush1.bf16.msra.mxu0 0
    %554 = vmatprep.subr.bf16.mxu0 0
    %555 = vmatpush1.bf16.msra.mxu0 0
    %556 = vmatprep.subr.bf16.mxu0 0
    %557 = vmatpush1.bf16.msra.mxu0 0
    %558 = vmatprep.subr.bf16.mxu0 0
    %559 = vmatpush1.bf16.msra.mxu0 0
    %560 = vmatprep.subr.bf16.mxu0 0
    %561 = vmatpush1.bf16.msra.mxu0 0
    %562 = vmatprep.subr.bf16.mxu0 0
    %563 = vmatpush1.bf16.msra.mxu0 0
    %564 = vmatprep.subr.bf16.mxu0 0
    %565 = vmatpush1.bf16.msra.mxu0 0
    %566 = vmatprep.subr.bf16.mxu0 0
    %567 = vmatpush1.bf16.msra.mxu0 0
    %568 = vmatprep.subr.bf16.mxu0 0
    %569 = vmatpush1.bf16.msra.mxu0 0
    %570 = vmatprep.subr.bf16.mxu0 0
    %571 = vmatpush1.bf16.msra.mxu0 0
    %572 = vmatprep.subr.bf16.mxu0 0
    %573 = vmatpush1.bf16.msra.mxu0 0
    %574 = vmatprep.mubr.bf16.mxu0 0
    %575 = vmatmul.mubr.bf16.gmra.mrb[0].mxu0 %v540
    %v576 = vpop.f32.mrb[0].mxu0
    %v577 = vadd.f32 %v524, %v576
    %v578 = vpop.f32.mrb[0].mxu0
    %v579 = vpop.f32.mrb[0].mxu0
    %v580 = vadd.f32 %v524, %v579
    %v581 = vpop.f32.mrb[0].mxu0
    %582 = vdwg.mxu0
    %v583 = vmax.f32 %v577, 0.0
    %v584 = vmax.f32 %v580, 0.0
    %v585 = vpack.c.bf16 %v584, %v583
    %v586 = vld [vmem:[%s7] sm:$0xf]
    %v587 = vld [vmem:[%s7 + $0x4] sm:$0xf]
    %v588 = vld [vmem:[%s7 + $0x8] sm:$0xf]
    %v589 = vld [vmem:[%s7 + $0xc] sm:$0xf]
    %v590 = vld [vmem:[%s8] sm:$0x1]
    %v592 = vlaneseq
    %v593 = vshrl.u32 %v592, 7
    %v594 = vsub.s32 0, %v593
    %v595 = vrot.slane %v590, %v594
    %v601 = vunpack.c.l.b16 %v586
    %v602 = vunpack.c.l.b16 %v587
    %v603 = vunpack.c.l.b16 %v588
    %v604 = vunpack.c.l.b16 %v589
    %v605 = vpack.c.b16 %v602, %v601
    %v606 = vpack.c.b16 %v604, %v603
    %v610 = vsel %vm538, %v585, 0
    %612 = vmatprep.subr.bf16.mxu0 0
    %613 = vmatpush1.bf16.msra.mxu0 %v605
    %614 = vmatprep.subr.bf16.mxu0 0
    %615 = vmatpush1.bf16.msra.mxu0 %v606
    %616 = vmatprep.subr.bf16.mxu0 0
    %617 = vmatpush1.bf16.msra.mxu0 0
    %618 = vmatprep.subr.bf16.mxu0 0
    %619 = vmatpush1.bf16.msra.mxu0 0
    %620 = vmatprep.subr.bf16.mxu0 0
    %621 = vmatpush1.bf16.msra.mxu0 0
    %622 = vmatprep.subr.bf16.mxu0 0
    %623 = vmatpush1.bf16.msra.mxu0 0
    %624 = vmatprep.subr.bf16.mxu0 0
    %625 = vmatpush1.bf16.msra.mxu0 0
    %626 = vmatprep.subr.bf16.mxu0 0
    %627 = vmatpush1.bf16.msra.mxu0 0
    %628 = vmatprep.subr.bf16.mxu0 0
    %629 = vmatpush1.bf16.msra.mxu0 0
    %630 = vmatprep.subr.bf16.mxu0 0
    %631 = vmatpush1.bf16.msra.mxu0 0
    %632 = vmatprep.subr.bf16.mxu0 0
    %633 = vmatpush1.bf16.msra.mxu0 0
    %634 = vmatprep.subr.bf16.mxu0 0
    %635 = vmatpush1.bf16.msra.mxu0 0
    %636 = vmatprep.subr.bf16.mxu0 0
    %637 = vmatpush1.bf16.msra.mxu0 0
    %638 = vmatprep.subr.bf16.mxu0 0
    %639 = vmatpush1.bf16.msra.mxu0 0
    %640 = vmatprep.subr.bf16.mxu0 0
    %641 = vmatpush1.bf16.msra.mxu0 0
    %642 = vmatprep.subr.bf16.mxu0 0
    %643 = vmatpush1.bf16.msra.mxu0 0
    %644 = vmatprep.mubr.bf16.mxu0 0
    %645 = vmatmul.mubr.bf16.gmra.mrb[0].mxu0 %v610
    %v646 = vpop.f32.mrb[0].mxu0
    %v647 = vadd.f32 %v595, %v646
    %v648 = vpop.f32.mrb[0].mxu0
    %v649 = vpop.f32.mrb[0].mxu0
    %v650 = vadd.f32 %v595, %v649
    %v651 = vpop.f32.mrb[0].mxu0
    %652 = vdwg.mxu0
    %v653 = vmax.f32 %v647, 0.0
    %v654 = vmax.f32 %v650, 0.0
    %v655 = vpack.c.bf16 %v654, %v653
    %v656 = vld [vmem:[%s9] sm:$0xff]
    %v657 = vld [vmem:[%s9 + $0x8] sm:$0xff]
    %v658 = vld [vmem:[%s9 + $0x10] sm:$0xff]
    %v659 = vld [vmem:[%s9 + $0x18] sm:$0xff]
    %v660 = vld [vmem:[%s9 + $0x20] sm:$0xff]
    %v661 = vld [vmem:[%s9 + $0x28] sm:$0xff]
    %v662 = vld [vmem:[%s9 + $0x30] sm:$0xff]
    %v663 = vld [vmem:[%s9 + $0x38] sm:$0xff]
    %v664 = vld [vmem:[%s9 + $0x40] sm:$0xff]
    %v665 = vld [vmem:[%s9 + $0x48] sm:$0xff]
    %v666 = vld [vmem:[%s9 + $0x50] sm:$0xff]
    %v667 = vld [vmem:[%s9 + $0x58] sm:$0xff]
    %v668 = vld [vmem:[%s9 + $0x60] sm:$0xff]
    %v669 = vld [vmem:[%s9 + $0x68] sm:$0xff]
    %v670 = vld [vmem:[%s9 + $0x70] sm:$0xff]
    %v671 = vld [vmem:[%s9 + $0x78] sm:$0xff]
    %v672 = vld [vmem:[%s9 + $0x80] sm:$0xff]
    %v673 = vld [vmem:[%s9 + $0x88] sm:$0xff]
    %v674 = vld [vmem:[%s9 + $0x90] sm:$0xff]
    %v675 = vld [vmem:[%s9 + $0x98] sm:$0xff]
    %v676 = vld [vmem:[%s9 + $0xa0] sm:$0xff]
    %v677 = vld [vmem:[%s9 + $0xa8] sm:$0xff]
    %v678 = vld [vmem:[%s9 + $0xb0] sm:$0xff]
    %v679 = vld [vmem:[%s9 + $0xb8] sm:$0xff]
    %v680 = vld [vmem:[%s9 + $0xc0] sm:$0xff]
    %v681 = vld [vmem:[%s9 + $0xc8] sm:$0xff]
    %v682 = vld [vmem:[%s9 + $0xd0] sm:$0xff]
    %v683 = vld [vmem:[%s9 + $0xd8] sm:$0xff]
    %v684 = vld [vmem:[%s9 + $0xe0] sm:$0xff]
    %v685 = vld [vmem:[%s9 + $0xe8] sm:$0xff]
    %v686 = vld [vmem:[%s9 + $0xf0] sm:$0xff]
    %v687 = vld [vmem:[%s9 + $0xf8] sm:$0xff]
    %v688 = vld [vmem:[%s10] sm:$0xf]
    %v690 = vlaneseq
    %v691 = vshrl.u32 %v690, 7
    %v692 = vsub.s32 0, %v691
    %v693 = vrot.slane %v688, %v692
    %v694 = vlaneseq
    %v695 = vshrl.u32 %v694, 7
    %v696 = vsub.s32 1, %v695
    %v697 = vrot.slane %v688, %v696
    %v698 = vlaneseq
    %v699 = vshrl.u32 %v698, 7
    %v700 = vsub.s32 2, %v699
    %v701 = vrot.slane %v688, %v700
    %v702 = vlaneseq
    %v703 = vshrl.u32 %v702, 7
    %v704 = vsub.s32 3, %v703
    %v705 = vrot.slane %v688, %v704
    %v742 = vunpack.c.l.b16 %v656
    %v743 = vunpack.c.h.b16 %v656
    %v744 = vunpack.c.l.b16 %v657
    %v745 = vunpack.c.h.b16 %v657
    %v746 = vunpack.c.l.b16 %v658
    %v747 = vunpack.c.h.b16 %v658
    %v748 = vunpack.c.l.b16 %v659
    %v749 = vunpack.c.h.b16 %v659
    %v750 = vunpack.c.l.b16 %v660
    %v751 = vunpack.c.h.b16 %v660
    %v752 = vunpack.c.l.b16 %v661
    %v753 = vunpack.c.h.b16 %v661
    %v754 = vunpack.c.l.b16 %v662
    %v755 = vunpack.c.h.b16 %v662
    %v756 = vunpack.c.l.b16 %v663
    %v757 = vunpack.c.h.b16 %v663
    %v758 = vunpack.c.l.b16 %v664
    %v759 = vunpack.c.h.b16 %v664
    %v760 = vunpack.c.l.b16 %v665
    %v761 = vunpack.c.h.b16 %v665
    %v762 = vunpack.c.l.b16 %v666
    %v763 = vunpack.c.h.b16 %v666
    %v764 = vunpack.c.l.b16 %v667
    %v765 = vunpack.c.h.b16 %v667
    %v766 = vunpack.c.l.b16 %v668
    %v767 = vunpack.c.h.b16 %v668
    %v768 = vunpack.c.l.b16 %v669
    %v769 = vunpack.c.h.b16 %v669
    %v770 = vunpack.c.l.b16 %v670
    %v771 = vunpack.c.h.b16 %v670
    %v772 = vunpack.c.l.b16 %v671
    %v773 = vunpack.c.h.b16 %v671
    %v774 = vunpack.c.l.b16 %v672
    %v775 = vunpack.c.h.b16 %v672
    %v776 = vunpack.c.l.b16 %v673
    %v777 = vunpack.c.h.b16 %v673
    %v778 = vunpack.c.l.b16 %v674
    %v779 = vunpack.c.h.b16 %v674
    %v780 = vunpack.c.l.b16 %v675
    %v781 = vunpack.c.h.b16 %v675
    %v782 = vunpack.c.l.b16 %v676
    %v783 = vunpack.c.h.b16 %v676
    %v784 = vunpack.c.l.b16 %v677
    %v785 = vunpack.c.h.b16 %v677
    %v786 = vunpack.c.l.b16 %v678
    %v787 = vunpack.c.h.b16 %v678
    %v788 = vunpack.c.l.b16 %v679
    %v789 = vunpack.c.h.b16 %v679
    %v790 = vunpack.c.l.b16 %v680
    %v791 = vunpack.c.h.b16 %v680
    %v792 = vunpack.c.l.b16 %v681
    %v793 = vunpack.c.h.b16 %v681
    %v794 = vunpack.c.l.b16 %v682
    %v795 = vunpack.c.h.b16 %v682
    %v796 = vunpack.c.l.b16 %v683
    %v797 = vunpack.c.h.b16 %v683
    %v798 = vunpack.c.l.b16 %v684
    %v799 = vunpack.c.h.b16 %v684
    %v800 = vunpack.c.l.b16 %v685
    %v801 = vunpack.c.h.b16 %v685
    %v802 = vunpack.c.l.b16 %v686
    %v803 = vunpack.c.h.b16 %v686
    %v804 = vunpack.c.l.b16 %v687
    %v805 = vunpack.c.h.b16 %v687
    %v806 = vpack.c.b16 %v746, %v742
    %v807 = vpack.c.b16 %v747, %v743
    %v808 = vpack.c.b16 %v748, %v744
    %v809 = vpack.c.b16 %v749, %v745
    %v810 = vpack.c.b16 %v754, %v750
    %v811 = vpack.c.b16 %v755, %v751
    %v812 = vpack.c.b16 %v756, %v752
    %v813 = vpack.c.b16 %v757, %v753
    %v814 = vpack.c.b16 %v762, %v758
    %v815 = vpack.c.b16 %v763, %v759
    %v816 = vpack.c.b16 %v764, %v760
    %v817 = vpack.c.b16 %v765, %v761
    %v818 = vpack.c.b16 %v770, %v766
    %v819 = vpack.c.b16 %v771, %v767
    %v820 = vpack.c.b16 %v772, %v768
    %v821 = vpack.c.b16 %v773, %v769
    %v822 = vpack.c.b16 %v778, %v774
    %v823 = vpack.c.b16 %v779, %v775
    %v824 = vpack.c.b16 %v780, %v776
    %v825 = vpack.c.b16 %v781, %v777
    %v826 = vpack.c.b16 %v786, %v782
    %v827 = vpack.c.b16 %v787, %v783
    %v828 = vpack.c.b16 %v788, %v784
    %v829 = vpack.c.b16 %v789, %v785
    %v830 = vpack.c.b16 %v794, %v790
    %v831 = vpack.c.b16 %v795, %v791
    %v832 = vpack.c.b16 %v796, %v792
    %v833 = vpack.c.b16 %v797, %v793
    %v834 = vpack.c.b16 %v802, %v798
    %v835 = vpack.c.b16 %v803, %v799
    %v836 = vpack.c.b16 %v804, %v800
    %v837 = vpack.c.b16 %v805, %v801
    %870 = vmatprep.subr.bf16.mxu0 %v807
    %871 = vmatpush1.bf16.msra.mxu0 %v806
    %872 = vmatprep.subr.bf16.mxu0 %v811
    %873 = vmatpush1.bf16.msra.mxu0 %v810
    %874 = vmatprep.subr.bf16.mxu0 %v815
    %875 = vmatpush1.bf16.msra.mxu0 %v814
    %876 = vmatprep.subr.bf16.mxu0 %v819
    %877 = vmatpush1.bf16.msra.mxu0 %v818
    %878 = vmatprep.subr.bf16.mxu0 %v823
    %879 = vmatpush1.bf16.msra.mxu0 %v822
    %880 = vmatprep.subr.bf16.mxu0 %v827
    %881 = vmatpush1.bf16.msra.mxu0 %v826
    %882 = vmatprep.subr.bf16.mxu0 %v831
    %883 = vmatpush1.bf16.msra.mxu0 %v830
    %884 = vmatprep.subr.bf16.mxu0 %v835
    %885 = vmatpush1.bf16.msra.mxu0 %v834
    %886 = vmatprep.subr.bf16.mxu0 0
    %887 = vmatpush1.bf16.msra.mxu0 0
    %888 = vmatprep.subr.bf16.mxu0 0
    %889 = vmatpush1.bf16.msra.mxu0 0
    %890 = vmatprep.subr.bf16.mxu0 0
    %891 = vmatpush1.bf16.msra.mxu0 0
    %892 = vmatprep.subr.bf16.mxu0 0
    %893 = vmatpush1.bf16.msra.mxu0 0
    %894 = vmatprep.subr.bf16.mxu0 0
    %895 = vmatpush1.bf16.msra.mxu0 0
    %896 = vmatprep.subr.bf16.mxu0 0
    %897 = vmatpush1.bf16.msra.mxu0 0
    %898 = vmatprep.subr.bf16.mxu0 0
    %899 = vmatpush1.bf16.msra.mxu0 0
    %900 = vmatprep.subr.bf16.mxu0 0
    %901 = vmatpush1.bf16.msra.mxu0 0
    %902 = vmatprep.mubr.bf16.mxu0 0
    %903 = vmatmul.mubr.bf16.gmra.mrb[0].mxu0 %v655
    %v904 = vpop.f32.mrb[0].mxu0
    %v905 = vadd.f32 %v693, %v904
    %v906 = vpop.f32.mrb[0].mxu0
    %v907 = vadd.f32 %v697, %v906
    %v908 = vpop.f32.mrb[0].mxu0
    %v909 = vadd.f32 %v693, %v908
    %v910 = vpop.f32.mrb[0].mxu0
    %v911 = vadd.f32 %v697, %v910
    %912 = vdwg.mxu0
    %913 = vmatprep.subr.bf16.mxu0 %v809
    %914 = vmatpush1.bf16.msra.mxu0 %v808
    %915 = vmatprep.subr.bf16.mxu0 %v813
    %916 = vmatpush1.bf16.msra.mxu0 %v812
    %917 = vmatprep.subr.bf16.mxu0 %v817
    %918 = vmatpush1.bf16.msra.mxu0 %v816
    %919 = vmatprep.subr.bf16.mxu0 %v821
    %920 = vmatpush1.bf16.msra.mxu0 %v820
    %921 = vmatprep.subr.bf16.mxu0 %v825
    %922 = vmatpush1.bf16.msra.mxu0 %v824
    %923 = vmatprep.subr.bf16.mxu0 %v829
    %924 = vmatpush1.bf16.msra.mxu0 %v828
    %925 = vmatprep.subr.bf16.mxu0 %v833
    %926 = vmatpush1.bf16.msra.mxu0 %v832
    %927 = vmatprep.subr.bf16.mxu0 %v837
    %928 = vmatpush1.bf16.msra.mxu0 %v836
    %929 = vmatprep.subr.bf16.mxu0 0
    %930 = vmatpush1.bf16.msra.mxu0 0
    %931 = vmatprep.subr.bf16.mxu0 0
    %932 = vmatpush1.bf16.msra.mxu0 0
    %933 = vmatprep.subr.bf16.mxu0 0
    %934 = vmatpush1.bf16.msra.mxu0 0
    %935 = vmatprep.subr.bf16.mxu0 0
    %936 = vmatpush1.bf16.msra.mxu0 0
    %937 = vmatprep.subr.bf16.mxu0 0
    %938 = vmatpush1.bf16.msra.mxu0 0
    %939 = vmatprep.subr.bf16.mxu0 0
    %940 = vmatpush1.bf16.msra.mxu0 0
    %941 = vmatprep.subr.bf16.mxu0 0
    %942 = vmatpush1.bf16.msra.mxu0 0
    %943 = vmatprep.subr.bf16.mxu0 0
    %944 = vmatpush1.bf16.msra.mxu0 0
    %945 = vmatprep.mubr.bf16.mxu0 0
    %946 = vmatmul.mubr.bf16.gmra.mrb[0].mxu0 %v655
    %v947 = vpop.f32.mrb[0].mxu0
    %v948 = vadd.f32 %v701, %v947
    %v949 = vpop.f32.mrb[0].mxu0
    %v950 = vadd.f32 %v705, %v949
    %v951 = vpop.f32.mrb[0].mxu0
    %v952 = vadd.f32 %v701, %v951
    %v953 = vpop.f32.mrb[0].mxu0
    %v954 = vadd.f32 %v705, %v953
    %955 = vdwg.mxu0
    %v956 = vsub.f32 0.0, %v905
    %v957 = vsub.f32 0.0, %v907
    %v958 = vsub.f32 0.0, %v948
    %v959 = vsub.f32 0.0, %v950
    %v960 = vsub.f32 0.0, %v909
    %v961 = vsub.f32 0.0, %v911
    %v962 = vsub.f32 0.0, %v952
    %v963 = vsub.f32 0.0, %v954
    %v964 = vmul.f32 %v956, 1.442695
    %v965 = vpow.pop %v964
    %v966 = vmul.f32 %v957, 1.442695
    %v967 = vpow.pop %v966
    %v968 = vmul.f32 %v958, 1.442695
    %v969 = vpow.pop %v968
    %v970 = vmul.f32 %v959, 1.442695
    %v971 = vpow.pop %v970
    %v972 = vmul.f32 %v960, 1.442695
    %v973 = vpow.pop %v972
    %v974 = vmul.f32 %v961, 1.442695
    %v975 = vpow.pop %v974
    %v976 = vmul.f32 %v962, 1.442695
    %v977 = vpow.pop %v976
    %v978 = vmul.f32 %v963, 1.442695
    %v979 = vpow.pop %v978
    %v980 = vadd.f32 %v965, 1.0
    %v981 = vadd.f32 %v967, 1.0
    %v982 = vadd.f32 %v969, 1.0
    %v983 = vadd.f32 %v971, 1.0
    %v984 = vadd.f32 %v973, 1.0
    %v985 = vadd.f32 %v975, 1.0
    %v986 = vadd.f32 %v977, 1.0
    %v987 = vadd.f32 %v979, 1.0
    %v988 = vrcp.pop %v980
    %v989 = vrcp.pop %v981
    %v990 = vrcp.pop %v982
    %v991 = vrcp.pop %v983
    %v992 = vrcp.pop %v984
    %v993 = vrcp.pop %v985
    %v994 = vrcp.pop %v986
    %v995 = vrcp.pop %v987
    %v996 = vpack.c.bf16 %v992, %v988
    %v997 = vpack.c.bf16 %v993, %v989
    %v998 = vpack.c.bf16 %v994, %v990
    %v999 = vpack.c.bf16 %v995, %v991
    %v1004 = vunpack.c.l.b16 %v996
    %v1005 = vunpack.c.l.b16 %v997
    %v1006 = vunpack.c.l.b16 %v998
    %v1007 = vunpack.c.l.b16 %v999
    %v1008 = vunpack.c.h.b16 %v996
    %v1009 = vunpack.c.h.b16 %v997
    %v1010 = vunpack.c.h.b16 %v998
    %v1011 = vunpack.c.h.b16 %v999
    %v1012 = vpack.c.b16 %v1005, %v1004
    %v1013 = vpack.c.b16 %v1007, %v1006
    %v1014 = vpack.c.b16 %v1009, %v1008
    %v1015 = vpack.c.b16 %v1011, %v1010
    %1020 = vst [vmem:[#allocation2] sm:$0xff] %v1012
    %1021 = vst [vmem:[#allocation2 + $0x8] sm:$0xff] %v1013
    %1022 = vst [vmem:[#allocation2 + $0x10] sm:$0xff] %v1014
    %1023 = vst [vmem:[#allocation2 + $0x18] sm:$0xff] %v1015
    // Predicated region
    $region46: #{autoencoder_forward.1} parent=1 // pred_check
      _
    $region47: #{autoencoder_forward.1} parent=1 // pred_check_branch
      %1025 = sbr.rel (0) target = $region49
    $region48: #{autoencoder_forward.1} parent=1 // pred_region
      %s1027 = ssub.s32 512, 512
      %1028 = vsyncadd [#allocation3], %s1027
      %s1029 = sshll.u32 [#allocation2], 4
      %s1030 = int_to_ptr.vmem [resolvable:$true] %s1029
      %1035 = dma.vmem_to_hbm [thread:$0]  %s1030, 512, %s11, [#allocation3], 256, 256, 16
    $region49: #{autoencoder_forward.1} parent=1 // pred_fallthru
      _
    // Predicated region
    $region50: #{autoencoder_forward.1} parent=1 // pred_check
      _
    $region51: #{autoencoder_forward.1} parent=1 // pred_check_branch
      %1037 = sbr.rel (0) target = $region53
    $region52: #{autoencoder_forward.1} parent=1 // pred_region
      %1038 = dma.done [#allocation3], 512
    $region53: #{autoencoder_forward.1} parent=1 // pred_fallthru
      _
    %1039 = vsyncpa [#allocation3], 1

</llo_original>
